<compile_context>
chip_gen: v7x
topology: tpu7x:2x2x1
jax: 0.10.0
libtpu: 0.0.40
codegen_flags: <defaults>
</compile_context>

<pallas_src>
import functools

import jax
import jax.numpy as jnp
from jax.experimental import pallas as pl
from jax.experimental.pallas import tpu as pltpu


EPS = 1e-8                      # matches CombinedLoss(eps=1e-08)
SMOOTH = 1.0                    # dice smooth
TILE_HW_CAP = 4096              # lane tile cap (multiple of 128)
TILE_NC_CAP = 512               # row tile cap (multiple of 8)
MAX_BLOCK_ELEMS = 512 * 1024    # per-input block volume (~2 MiB f32)


def _round_up(x, m):
    return ((x + m - 1) // m) * m


def _choose_tiles(nc, hw):
    """Pick (tile_nc, tile_hw): lane-dense, VMEM-bounded, megacore-friendly."""
    # Lane (HW) tile: 128-aligned when possible, bounded; else full dim.
    if hw % 128 == 0:
        tile_hw = min(hw, TILE_HW_CAP)
    elif hw > TILE_HW_CAP:
        tile_hw = TILE_HW_CAP           # partial (masked) last tile
    else:
        tile_hw = hw                    # full dim (always legal)

    # Row (NC) tile: multiple of 8, bounded by the volume budget.  Padded rows
    # are harmless: the kernel emits per-row partials and the wrapper slices
    # the first nc rows, so no in-kernel row masking is needed.
    if nc <= 8:
        tile_nc = nc                    # full dim (legal even if not mult of 8)
    else:
        budget_rows = max(8, (MAX_BLOCK_ELEMS // tile_hw) // 8 * 8)
        tile_nc = min(TILE_NC_CAP, _round_up(nc, 8), budget_rows)
        # Megacore (v7x): guarantee >= 2 blocks on the "parallel" NC axis.
        if pl.cdiv(nc, tile_nc) < 2:
            half = max(8, _round_up(pl.cdiv(nc, 2), 8))
            tile_nc = min(tile_nc, half)
    return tile_nc, tile_hw


def _combined_loss_kernel(preds_ref, target_ref, bce_out_ref, dice_out_ref,
                          inter_acc, sump_acc, sumt_acc, bce_acc,
                          *, hw, tile_nc, tile_hw, use_logits_bce):
    """Grid = (NC-block i [parallel], HW-tile k [arbitrary/reduction])."""
    k = pl.program_id(1)
    k_last = pl.num_programs(1) - 1

    # ---- init per-row accumulators at the start of each HW sweep ----
    @pl.when(k == 0)
    def _init():
        inter_acc[...] = jnp.zeros_like(inter_acc)
        sump_acc[...] = jnp.zeros_like(sump_acc)
        sumt_acc[...] = jnp.zeros_like(sumt_acc)
        bce_acc[...] = jnp.zeros_like(bce_acc)

    logits = preds_ref[...].astype(jnp.float32)
    t = target_ref[...].astype(jnp.float32)

    if use_logits_bce:
        # Shared-exponential logits form: fewer EUP pushes, but numerically
        # differs from the eps-based PyTorch form for |logit| >~ 17.
        e = jnp.exp(-jnp.abs(logits))
        r = pl.reciprocal(1.0 + e, approx=True)
        p = jnp.where(logits >= 0, r, e * r)
        bce_elem = jnp.maximum(logits, 0.0) - logits * t + jnp.log1p(e)
    else:
        # Bit-faithful to the torch module: sigmoid + eps-based logs.
        p = jax.nn.sigmoid(logits)
        bce_elem = -jnp.log(p + EPS) * t - jnp.log(1.0 - p + EPS) * (1.0 - t)

    def _accumulate(p_, t_, bce_):
        # Lane-axis (XLU) partial reductions, accumulated across HW tiles.
        inter_acc[...] += jnp.sum(p_ * t_, axis=-1, keepdims=True)
        sump_acc[...] += jnp.sum(p_, axis=-1, keepdims=True)
        sumt_acc[...] += jnp.sum(t_, axis=-1, keepdims=True)
        bce_acc[...] += jnp.sum(bce_, axis=-1, keepdims=True)

    need_col_mask = (hw % tile_hw) != 0      # static (trace time)
    if need_col_mask:
        is_edge = k == k_last

        @pl.when(is_edge)
        def _masked_tile():
            rem = hw % tile_hw               # static remainder (> 0 here)
            col = jax.lax.broadcasted_iota(jnp.int32, (tile_nc, tile_hw), 1)
            valid = col < rem
            # Select (not multiply) so NaN/Inf HBM padding is discarded.
            _accumulate(jnp.where(valid, p, 0.0),
                        jnp.where(valid, t, 0.0),
                        jnp.where(valid, bce_elem, 0.0))

        @pl.when(jnp.logical_not(is_edge))
        def _interior_tile():
            _accumulate(p, t, bce_elem)      # unmasked fast path
    else:
        _accumulate(p, t, bce_elem)

    # ---- finalize: emit per-row partials (padded rows sliced in wrapper) ----
    @pl.when(k == k_last)
    def _finalize():
        dice = (2.0 * inter_acc[...] + SMOOTH) / (
            sump_acc[...] + sumt_acc[...] + SMOOTH)   # (tile_nc, 1)
        dice_out_ref[...] = dice
        bce_out_ref[...] = bce_acc[...]


def combined_loss(preds_nchw, target_nchw, weight=0.7, *, use_logits_bce=False):
    """preds_nchw (logits), target_nchw: (N, C, H, W), any float dtype.
    Returns scalar f32 loss = weight * BCE + (1 - weight) * DiceLoss."""
    n, c, h, w = preds_nchw.shape
    nc, hw = n * c, h * w

    # Keep native dtype (e.g. bf16) -> halves HBM traffic; upcast in-kernel.
    preds2d = preds_nchw.reshape(nc, hw)
    target2d = target_nchw.reshape(nc, hw)

    tile_nc, tile_hw = _choose_tiles(nc, hw)
    grid_i = pl.cdiv(nc, tile_nc)
    grid_k = pl.cdiv(hw, tile_hw)
    nc_pad = grid_i * tile_nc

    kernel = functools.partial(
        _combined_loss_kernel, hw=hw, tile_nc=tile_nc, tile_hw=tile_hw,
        use_logits_bce=use_logits_bce)

    in_bytes = nc * hw * (preds2d.dtype.itemsize + target2d.dtype.itemsize)
    cost = pl.CostEstimate(
        flops=12 * nc * hw,
        transcendentals=3 * nc * hw,     # sigmoid exp + 2 logs per element
        bytes_accessed=in_bytes + 2 * nc_pad * 4,
    )

    bce_rows, dice_rows = pl.pallas_call(
        kernel,
        out_shape=(jax.ShapeDtypeStruct((nc_pad, 1), jnp.float32),   # bce row sums
                   jax.ShapeDtypeStruct((nc_pad, 1), jnp.float32)),  # dice per row
        grid_spec=pltpu.PrefetchScalarGridSpec(
            num_scalar_prefetch=0,
            grid=(grid_i, grid_k),
            in_specs=[
                pl.BlockSpec((tile_nc, tile_hw), lambda i, k: (i, k)),  # preds
                pl.BlockSpec((tile_nc, tile_hw), lambda i, k: (i, k)),  # target
            ],
            out_specs=(
                pl.BlockSpec((tile_nc, 1), lambda i, k: (i, 0)),
                pl.BlockSpec((tile_nc, 1), lambda i, k: (i, 0)),
            ),
            scratch_shapes=[
                pltpu.VMEM((tile_nc, 1), jnp.float32),   # inter
                pltpu.VMEM((tile_nc, 1), jnp.float32),   # sum_p
                pltpu.VMEM((tile_nc, 1), jnp.float32),   # sum_t
                pltpu.VMEM((tile_nc, 1), jnp.float32),   # bce row sums
            ],
        ),
        compiler_params=pltpu.CompilerParams(
            dimension_semantics=("parallel", "arbitrary"),
            vmem_limit_bytes=32 * 1024 * 1024,
        ),
        cost_estimate=cost,
    )(preds2d, target2d)

    # Tiny scalar combine in the wrapper; padded rows (>= nc) are sliced away.
    bce_valid = bce_rows[:nc, 0]
    dice_valid = dice_rows[:nc, 0]
    w_val = jnp.asarray(weight, dtype=jnp.float32)
    bce_mean = jnp.sum(bce_valid) / jnp.float32(nc * hw)
    dice_mean = jnp.sum(dice_valid) / jnp.float32(nc)
    dice_loss = 1.0 - dice_mean
    return w_val * bce_mean + (1.0 - w_val) * dice_loss


def combined_loss_ref(preds_nchw, target_nchw, weight=0.7):
    """Pure-JAX reference mirroring the PyTorch module forward()."""
    p = jax.nn.sigmoid(preds_nchw.astype(jnp.float32))
    t = target_nchw.astype(jnp.float32)
    bce = jnp.mean(-jnp.log(p + EPS) * t - jnp.log(1.0 - p + EPS) * (1.0 - t))
    inter = jnp.sum(p * t, axis=(2, 3))
    union = jnp.sum(p, axis=(2, 3)) + jnp.sum(t, axis=(2, 3))
    dice = jnp.mean((2.0 * inter + SMOOTH) / (union + SMOOTH))
    return weight * bce + (1.0 - weight) * (1.0 - dice)


if __name__ == "__main__":
    WEIGHT = 0.7   # deterministic init: nn.Parameter(torch.tensor(0.7))

    key = jax.random.PRNGKey(0)
    k1, k2, k3, k4, k5, k6 = jax.random.split(key, 6)

    # ---- Test 1: small f32 case (single tile, no masking) ----
    N, C, H, W = 2, 4, 16, 16
    preds = jax.random.normal(k1, (N, C, H, W), dtype=jnp.float32)            # logits
    target = jax.random.bernoulli(k2, 0.5, (N, C, H, W)).astype(jnp.float32)  # mask
    loss = jax.block_until_ready(combined_loss(preds, target, WEIGHT))
    ref = jax.block_until_ready(combined_loss_ref(preds, target, WEIGHT))
    assert jnp.allclose(loss, ref, rtol=1e-5, atol=1e-5), (loss, ref)

    # ---- Test 2: bf16 inputs, full-dim (non-aligned) tiles ----
    N2, C2, H2, W2 = 2, 3, 40, 40   # NC=6 (full-row block), HW=1600 (full-lane block)
    preds2 = jax.random.normal(k3, (N2, C2, H2, W2), dtype=jnp.float32).astype(jnp.bfloat16)
    target2 = jax.random.bernoulli(k4, 0.5, (N2, C2, H2, W2)).astype(jnp.bfloat16)
    loss2 = jax.block_until_ready(combined_loss(preds2, target2, WEIGHT))
    ref2 = jax.block_until_ready(combined_loss_ref(preds2, target2, WEIGHT))
    assert jnp.allclose(loss2, ref2, rtol=1e-4, atol=1e-4), (loss2, ref2)

    # ---- Test 3: multi-tile both axes, masked last HW tile + padded NC rows,
    #              >= 2 parallel NC blocks (megacore path) ----
    N3, C3, H3, W3 = 2, 5, 68, 68   # NC=10 -> tile_nc=8 (2 blocks); HW=4624 -> 2 HW tiles
    preds3 = jax.random.normal(k5, (N3, C3, H3, W3), dtype=jnp.float32)
    target3 = jax.random.bernoulli(k6, 0.5, (N3, C3, H3, W3)).astype(jnp.float32)
    loss3 = jax.block_until_ready(combined_loss(preds3, target3, WEIGHT))
    ref3 = jax.block_until_ready(combined_loss_ref(preds3, target3, WEIGHT))
    assert jnp.allclose(loss3, ref3, rtol=1e-4, atol=1e-4), (loss3, ref3)

    print("KERNEL_OK")
</pallas_src>

<mosaic_0001>
module attributes {stable_mosaic.version = 11 : i64} {
  func.func @_combined_loss_kernel(%arg0: i32, %arg1: i32, %arg2: memref<8x256xf32, #tpu.memory_space<vmem>>, %arg3: memref<8x256xf32, #tpu.memory_space<vmem>>, %arg4: memref<8x1xf32, #tpu.memory_space<vmem>>, %arg5: memref<8x1xf32, #tpu.memory_space<vmem>>, %arg6: memref<8x1xf32, #tpu.memory_space<vmem>>, %arg7: memref<8x1xf32, #tpu.memory_space<vmem>>, %arg8: memref<8x1xf32, #tpu.memory_space<vmem>>, %arg9: memref<8x1xf32, #tpu.memory_space<vmem>>) attributes {dimension_semantics = [#tpu.dimension_semantics<parallel>, #tpu.dimension_semantics<arbitrary>], iteration_bounds = array<i64: 1, 1>, scalar_prefetch = 0 : i64, scratch_operands = 4 : i64, tpu.core_type = #tpu.core_type<tc>, window_params = [{transform_indices = @transform_0, window_bounds = array<i64: 8, 256>}, {transform_indices = @transform_1, window_bounds = array<i64: 8, 256>}, {transform_indices = @transform_2, window_bounds = array<i64: 8, 1>}, {transform_indices = @transform_3, window_bounds = array<i64: 8, 1>}]} {
    %c0_i32 = arith.constant 0 : i32
    %0 = arith.cmpi eq, %arg1, %c0_i32 : i32
    %1 = arith.extui %0 : i1 to i32
    %c0_i32_0 = arith.constant 0 : i32
    %2 = arith.cmpi ne, %1, %c0_i32_0 : i32
    scf.if %2 {
      %cst_31 = arith.constant 0.000000e+00 : f32
      %49 = vector.broadcast %cst_31 : f32 to vector<8x1xf32>
      %c0_32 = arith.constant 0 : index
      %c0_33 = arith.constant 0 : index
      %50 = vector.load %arg6[%c0_32, %c0_33] : memref<8x1xf32, #tpu.memory_space<vmem>>, vector<8x1xf32>
      tpu.vector_store %arg6[%c0_32, %c0_33], %49 {strides = array<i32>} : memref<8x1xf32, #tpu.memory_space<vmem>>, vector<8x1xf32>,
      %cst_34 = arith.constant 0.000000e+00 : f32
      %51 = vector.broadcast %cst_34 : f32 to vector<8x1xf32>
      %c0_35 = arith.constant 0 : index
      %c0_36 = arith.constant 0 : index
      %52 = vector.load %arg7[%c0_35, %c0_36] : memref<8x1xf32, #tpu.memory_space<vmem>>, vector<8x1xf32>
      tpu.vector_store %arg7[%c0_35, %c0_36], %51 {strides = array<i32>} : memref<8x1xf32, #tpu.memory_space<vmem>>, vector<8x1xf32>,
      %cst_37 = arith.constant 0.000000e+00 : f32
      %53 = vector.broadcast %cst_37 : f32 to vector<8x1xf32>
      %c0_38 = arith.constant 0 : index
      %c0_39 = arith.constant 0 : index
      %54 = vector.load %arg8[%c0_38, %c0_39] : memref<8x1xf32, #tpu.memory_space<vmem>>, vector<8x1xf32>
      tpu.vector_store %arg8[%c0_38, %c0_39], %53 {strides = array<i32>} : memref<8x1xf32, #tpu.memory_space<vmem>>, vector<8x1xf32>,
      %cst_40 = arith.constant 0.000000e+00 : f32
      %55 = vector.broadcast %cst_40 : f32 to vector<8x1xf32>
      %c0_41 = arith.constant 0 : index
      %c0_42 = arith.constant 0 : index
      %56 = vector.load %arg9[%c0_41, %c0_42] : memref<8x1xf32, #tpu.memory_space<vmem>>, vector<8x1xf32>
      tpu.vector_store %arg9[%c0_41, %c0_42], %55 {strides = array<i32>} : memref<8x1xf32, #tpu.memory_space<vmem>>, vector<8x1xf32>,
    } else {
    }
    %c0 = arith.constant 0 : index
    %c0_1 = arith.constant 0 : index
    %3 = vector.load %arg2[%c0, %c0_1] : memref<8x256xf32, #tpu.memory_space<vmem>>, vector<8x256xf32>
    %c0_2 = arith.constant 0 : index
    %c0_3 = arith.constant 0 : index
    %4 = vector.load %arg3[%c0_2, %c0_3] : memref<8x256xf32, #tpu.memory_space<vmem>>, vector<8x256xf32>
    %5 = arith.negf %3 : vector<8x256xf32>
    %6 = math.exp %5 : vector<8x256xf32>
    %cst = arith.constant 1.000000e+00 : f32
    %7 = vector.broadcast %cst : f32 to vector<8x256xf32>
    %8 = arith.addf %7, %6 : vector<8x256xf32>
    %9 = arith.divf %7, %8 : vector<8x256xf32>
    %cst_4 = arith.constant 9.99999993E-9 : f32
    %10 = vector.broadcast %cst_4 : f32 to vector<8x256xf32>
    %11 = arith.addf %9, %10 : vector<8x256xf32>
    %12 = math.log %11 : vector<8x256xf32>
    %cst_5 = arith.constant 0.000000e+00 : f32
    %13 = vector.broadcast %cst_5 : f32 to vector<8x256xf32>
    %14 = arith.subf %13, %12 : vector<8x256xf32>
    %15 = arith.mulf %14, %4 : vector<8x256xf32>
    %cst_6 = arith.constant 1.000000e+00 : f32
    %16 = vector.broadcast %cst_6 : f32 to vector<8x256xf32>
    %17 = arith.subf %16, %9 : vector<8x256xf32>
    %cst_7 = arith.constant 9.99999993E-9 : f32
    %18 = vector.broadcast %cst_7 : f32 to vector<8x256xf32>
    %19 = arith.addf %17, %18 : vector<8x256xf32>
    %20 = math.log %19 : vector<8x256xf32>
    %cst_8 = arith.constant 1.000000e+00 : f32
    %21 = vector.broadcast %cst_8 : f32 to vector<8x256xf32>
    %22 = arith.subf %21, %4 : vector<8x256xf32>
    %23 = arith.mulf %20, %22 : vector<8x256xf32>
    %24 = arith.subf %15, %23 : vector<8x256xf32>
    %c0_9 = arith.constant 0 : index
    %c0_10 = arith.constant 0 : index
    %25 = vector.load %arg6[%c0_9, %c0_10] : memref<8x1xf32, #tpu.memory_space<vmem>>, vector<8x1xf32>
    %26 = arith.mulf %9, %4 : vector<8x256xf32>
    %cst_11 = arith.constant dense<0.000000e+00> : vector<8xf32>
    %27 = vector.multi_reduction <add>, %26, %cst_11 [1] : vector<8x256xf32> to vector<8xf32>
    %28 = vector.shape_cast %27 : vector<8xf32> to vector<8x1xf32>
    %29 = arith.addf %25, %28 : vector<8x1xf32>
    %c0_12 = arith.constant 0 : index
    %c0_13 = arith.constant 0 : index
    %30 = vector.load %arg6[%c0_12, %c0_13] : memref<8x1xf32, #tpu.memory_space<vmem>>, vector<8x1xf32>
    tpu.vector_store %arg6[%c0_12, %c0_13], %29 {strides = array<i32>} : memref<8x1xf32, #tpu.memory_space<vmem>>, vector<8x1xf32>,
    %c0_14 = arith.constant 0 : index
    %c0_15 = arith.constant 0 : index
    %31 = vector.load %arg7[%c0_14, %c0_15] : memref<8x1xf32, #tpu.memory_space<vmem>>, vector<8x1xf32>
    %cst_16 = arith.constant dense<0.000000e+00> : vector<8xf32>
    %32 = vector.multi_reduction <add>, %9, %cst_16 [1] : vector<8x256xf32> to vector<8xf32>
    %33 = vector.shape_cast %32 : vector<8xf32> to vector<8x1xf32>
    %34 = arith.addf %31, %33 : vector<8x1xf32>
    %c0_17 = arith.constant 0 : index
    %c0_18 = arith.constant 0 : index
    %35 = vector.load %arg7[%c0_17, %c0_18] : memref<8x1xf32, #tpu.memory_space<vmem>>, vector<8x1xf32>
    tpu.vector_store %arg7[%c0_17, %c0_18], %34 {strides = array<i32>} : memref<8x1xf32, #tpu.memory_space<vmem>>, vector<8x1xf32>,
    %c0_19 = arith.constant 0 : index
    %c0_20 = arith.constant 0 : index
    %36 = vector.load %arg8[%c0_19, %c0_20] : memref<8x1xf32, #tpu.memory_space<vmem>>, vector<8x1xf32>
    %cst_21 = arith.constant dense<0.000000e+00> : vector<8xf32>
    %37 = vector.multi_reduction <add>, %4, %cst_21 [1] : vector<8x256xf32> to vector<8xf32>
    %38 = vector.shape_cast %37 : vector<8xf32> to vector<8x1xf32>
    %39 = arith.addf %36, %38 : vector<8x1xf32>
    %c0_22 = arith.constant 0 : index
    %c0_23 = arith.constant 0 : index
    %40 = vector.load %arg8[%c0_22, %c0_23] : memref<8x1xf32, #tpu.memory_space<vmem>>, vector<8x1xf32>
    tpu.vector_store %arg8[%c0_22, %c0_23], %39 {strides = array<i32>} : memref<8x1xf32, #tpu.memory_space<vmem>>, vector<8x1xf32>,
    %c0_24 = arith.constant 0 : index
    %c0_25 = arith.constant 0 : index
    %41 = vector.load %arg9[%c0_24, %c0_25] : memref<8x1xf32, #tpu.memory_space<vmem>>, vector<8x1xf32>
    %cst_26 = arith.constant dense<0.000000e+00> : vector<8xf32>
    %42 = vector.multi_reduction <add>, %24, %cst_26 [1] : vector<8x256xf32> to vector<8xf32>
    %43 = vector.shape_cast %42 : vector<8xf32> to vector<8x1xf32>
    %44 = arith.addf %41, %43 : vector<8x1xf32>
    %c0_27 = arith.constant 0 : index
    %c0_28 = arith.constant 0 : index
    %45 = vector.load %arg9[%c0_27, %c0_28] : memref<8x1xf32, #tpu.memory_space<vmem>>, vector<8x1xf32>
    tpu.vector_store %arg9[%c0_27, %c0_28], %44 {strides = array<i32>} : memref<8x1xf32, #tpu.memory_space<vmem>>, vector<8x1xf32>,
    %c0_i32_29 = arith.constant 0 : i32
    %46 = arith.cmpi eq, %arg1, %c0_i32_29 : i32
    %47 = arith.extui %46 : i1 to i32
    %c0_i32_30 = arith.constant 0 : i32
    %48 = arith.cmpi ne, %47, %c0_i32_30 : i32
    scf.if %48 {
      %c0_31 = arith.constant 0 : index
      %c0_32 = arith.constant 0 : index
      %49 = vector.load %arg6[%c0_31, %c0_32] : memref<8x1xf32, #tpu.memory_space<vmem>>, vector<8x1xf32>
      %cst_33 = arith.constant 2.000000e+00 : f32
      %50 = vector.broadcast %cst_33 : f32 to vector<8x1xf32>
      %51 = arith.mulf %50, %49 : vector<8x1xf32>
      %cst_34 = arith.constant 1.000000e+00 : f32
      %52 = vector.broadcast %cst_34 : f32 to vector<8x1xf32>
      %53 = arith.addf %51, %52 : vector<8x1xf32>
      %c0_35 = arith.constant 0 : index
      %c0_36 = arith.constant 0 : index
      %54 = vector.load %arg7[%c0_35, %c0_36] : memref<8x1xf32, #tpu.memory_space<vmem>>, vector<8x1xf32>
      %c0_37 = arith.constant 0 : index
      %c0_38 = arith.constant 0 : index
      %55 = vector.load %arg8[%c0_37, %c0_38] : memref<8x1xf32, #tpu.memory_space<vmem>>, vector<8x1xf32>
      %56 = arith.addf %54, %55 : vector<8x1xf32>
      %cst_39 = arith.constant 1.000000e+00 : f32
      %57 = vector.broadcast %cst_39 : f32 to vector<8x1xf32>
      %58 = arith.addf %56, %57 : vector<8x1xf32>
      %59 = arith.divf %53, %58 : vector<8x1xf32>
      %c0_40 = arith.constant 0 : index
      %c0_41 = arith.constant 0 : index
      %60 = vector.load %arg5[%c0_40, %c0_41] : memref<8x1xf32, #tpu.memory_space<vmem>>, vector<8x1xf32>
      tpu.vector_store %arg5[%c0_40, %c0_41], %59 {strides = array<i32>} : memref<8x1xf32, #tpu.memory_space<vmem>>, vector<8x1xf32>,
      %c0_42 = arith.constant 0 : index
      %c0_43 = arith.constant 0 : index
      %61 = vector.load %arg9[%c0_42, %c0_43] : memref<8x1xf32, #tpu.memory_space<vmem>>, vector<8x1xf32>
      %c0_44 = arith.constant 0 : index
      %c0_45 = arith.constant 0 : index
      %62 = vector.load %arg4[%c0_44, %c0_45] : memref<8x1xf32, #tpu.memory_space<vmem>>, vector<8x1xf32>
      tpu.vector_store %arg4[%c0_44, %c0_45], %61 {strides = array<i32>} : memref<8x1xf32, #tpu.memory_space<vmem>>, vector<8x1xf32>,
    } else {
    }
    return
  }
  func.func @transform_0(%arg0: i32, %arg1: i32) -> (i32, i32) {
    %c0_i32 = arith.constant 0 : i32
    return %arg0, %arg1 : i32, i32
  }
  func.func @transform_1(%arg0: i32, %arg1: i32) -> (i32, i32) {
    %c0_i32 = arith.constant 0 : i32
    return %arg0, %arg1 : i32, i32
  }
  func.func @transform_2(%arg0: i32, %arg1: i32) -> (i32, i32) {
    %c0_i32 = arith.constant 0 : i32
    %c0_i32_0 = arith.constant 0 : i32
    return %arg0, %c0_i32 : i32, i32
  }
  func.func @transform_3(%arg0: i32, %arg1: i32) -> (i32, i32) {
    %c0_i32 = arith.constant 0 : i32
    %c0_i32_0 = arith.constant 0 : i32
    return %arg0, %c0_i32 : i32, i32
  }
}

</mosaic_0001>

<llo_original>
// kernel: tpu_custom_call.1
$region0: #{tpu_custom_call.1}
  #allocation0 [shape = 'u32[]', space=smem, size = 0x4, offset = 0x4, fixed_abs, tag = 'smem constant byte address 0x4 - core index']
  #allocation1 [shape = 'u32[144,128]{1,0:T(1,128)}', space=vmem, size = 0x12000, scoped, tag = 'internal scratch']
  #allocation2 [shape = 'f32[8,1]{1,0:T(8,128)}', space=vmem, size = 0x1000, scoped, tag = 'scratch operand']
  #allocation3 [shape = 'f32[8,1]{1,0:T(8,128)}', space=vmem, size = 0x1000, scoped, tag = 'scratch operand']
  #allocation4 [shape = 'f32[8,1]{1,0:T(8,128)}', space=vmem, size = 0x1000, scoped, tag = 'scratch operand']
  #allocation5 [shape = 'f32[8,1]{1,0:T(8,128)}', space=vmem, size = 0x1000, scoped, tag = 'scratch operand']
  %s0 = inlined_call_operand.hbm [shape: f32[8,256], index: 0, kind: input, shape index: {}]
  %s1 = inlined_call_operand.hbm [shape: f32[8,256], index: 1, kind: input, shape index: {}]
  %s2 = inlined_call_operand.vmem [shape: f32[8,1], index: 2, kind: output, shape index: {0}]
  %s3 = inlined_call_operand.vmem [shape: f32[8,1], index: 3, kind: output, shape index: {1}]
  %4 = xla_tuple %s2, %s3
  %s5 = sld [smem:[#allocation0]]
  $region42: #{tpu_custom_call.1} parent=0
    _
  %s7 = ssub.s32 1, %s5
  %s8 = scalar_select 0, %s7, %s5
  $region1: #{tpu_custom_call.1} parent=0
    #allocation6 [shape = 'u8[8192]{0}', space=vmem, size = 0x2000, scoped, tag = 'input window, operand 0, single buffered']
    #allocation7 [shape = 's32[1]{0}', space=sflag, size = 0x4, scoped, tag = 'scoped memory for tpu_custom_call.1']
    #allocation8 [shape = 'u8[8192]{0}', space=vmem, size = 0x2000, scoped, tag = 'input window, operand 1, single buffered']
    #allocation9 [shape = 's32[1]{0}', space=sflag, size = 0x4, scoped, tag = 'scoped memory for tpu_custom_call.1']
    %9 = vsyncpa [#allocation7], 0
    %10 = vsyncpa [#allocation9], 0
    // Predicated region
    $region2: #{tpu_custom_call.1} parent=1 // pred_check
      _
    $region3: #{tpu_custom_call.1} parent=1 // pred_check_branch
      %12 = sbr.rel (0) target = $region5
    $region4: #{tpu_custom_call.1} parent=1 // pred_region
      %s14 = ssub.s32 256, 256
      %15 = vsyncadd [#allocation7], %s14
      %s17 = sshll.u32 [#allocation6], 4
      %s18 = int_to_ptr.vmem [resolvable:$true] %s17
      %20 = dma.hbm_to_vmem [thread:$0]  %s0, 256, %s18, [#allocation7]
    $region5: #{tpu_custom_call.1} parent=1 // pred_fallthru
      _
    // Predicated region
    $region6: #{tpu_custom_call.1} parent=1 // pred_check
      _
    $region7: #{tpu_custom_call.1} parent=1 // pred_check_branch
      %22 = sbr.rel (0) target = $region9
    $region8: #{tpu_custom_call.1} parent=1 // pred_region
      %s24 = ssub.s32 256, 256
      %25 = vsyncadd [#allocation9], %s24
      %s27 = sshll.u32 [#allocation8], 4
      %s28 = int_to_ptr.vmem [resolvable:$true] %s27
      %30 = dma.hbm_to_vmem [thread:$0]  %s1, 256, %s28, [#allocation9]
    $region9: #{tpu_custom_call.1} parent=1 // pred_fallthru
      _
    // Predicated region
    $region10: #{tpu_custom_call.1} parent=1 // pred_check
      _
    $region11: #{tpu_custom_call.1} parent=1 // pred_check_branch
      %32 = sbr.rel (0) target = $region13
    $region12: #{tpu_custom_call.1} parent=1 // pred_region
      %33 = dma.done [#allocation7], 256
    $region13: #{tpu_custom_call.1} parent=1 // pred_fallthru
      _
    // Predicated region
    $region14: #{tpu_custom_call.1} parent=1 // pred_check
      _
    $region15: #{tpu_custom_call.1} parent=1 // pred_check_branch
      %35 = sbr.rel (0) target = $region17
    $region16: #{tpu_custom_call.1} parent=1 // pred_region
      %36 = dma.done [#allocation9], 256
    $region17: #{tpu_custom_call.1} parent=1 // pred_fallthru
      _
    %p37 = scmp.eq.s32.totalorder 0, 0
    // Predicated region
    $region18: #{tpu_custom_call.1} parent=1 // pred_check
      %p38 = pneg %p37
    $region19: #{tpu_custom_call.1} parent=1 // pred_check_branch
      %40 = sbr.rel (%p38) target = $region21
    $region20: #{tpu_custom_call.1} parent=1 // pred_region
      %vm41 = vcmask 7168
      %42 = vst.msk [vmem:[#allocation2] sm:$0xff] %vm41, 0.0
      %43 = vst.msk [vmem:[#allocation3] sm:$0xff] %vm41, 0.0
      %44 = vst.msk [vmem:[#allocation4] sm:$0xff] %vm41, 0.0
      %45 = vst.msk [vmem:[#allocation5] sm:$0xff] %vm41, 0.0
    $region21: #{tpu_custom_call.1} parent=1 // pred_fallthru
      _
    %v46 = vld [vmem:[#allocation6] sm:$0xff]
    %v47 = vld [vmem:[#allocation6 + $0x8] sm:$0xff]
    %v48 = vld [vmem:[#allocation8] sm:$0xff]
    %v49 = vld [vmem:[#allocation8 + $0x8] sm:$0xff]
    %v50 = vxor.u32 %v46, 2147483648
    %v51 = vxor.u32 %v47, 2147483648
    %v52 = vmul.f32 %v50, 1.442695
    %v53 = vpow.pop %v52
    %v54 = vmul.f32 %v51, 1.442695
    %v55 = vpow.pop %v54
    %v56 = vadd.f32 %v53, 1.0
    %v57 = vadd.f32 %v55, 1.0
    %v58 = vrcp.pop %v56
    %v59 = vmul.f32 1.0, %v58
    %v60 = vrcp.pop %v57
    %v61 = vmul.f32 1.0, %v60
    %v62 = vadd.f32 %v59, 1e-08
    %v63 = vadd.f32 %v61, 1e-08
    %v64 = vlog2.pop %v62
    %v65 = vmul.f32 %v64, 0.6931472
    %v66 = vlog2.pop %v63
    %v67 = vmul.f32 %v66, 0.6931472
    %v68 = vsub.f32 0.0, %v65
    %v69 = vsub.f32 0.0, %v67
    %v70 = vmul.f32 %v68, %v48
    %v71 = vmul.f32 %v69, %v49
    %v72 = vsub.f32 1.0, %v59
    %v73 = vsub.f32 1.0, %v61
    %v74 = vadd.f32 %v72, 1e-08
    %v75 = vadd.f32 %v73, 1e-08
    %v76 = vlog2.pop %v74
    %v77 = vmul.f32 %v76, 0.6931472
    %v78 = vlog2.pop %v75
    %v79 = vmul.f32 %v78, 0.6931472
    %v80 = vsub.f32 1.0, %v48
    %v81 = vsub.f32 1.0, %v49
    %v82 = vmul.f32 %v77, %v80
    %v83 = vmul.f32 %v79, %v81
    %v84 = vsub.f32 %v70, %v82
    %v85 = vsub.f32 %v71, %v83
    %v86 = vld [vmem:[#allocation2] sm:$0xff]
    %v87 = vmul.f32 %v59, %v48
    %v88 = vmul.f32 %v61, %v49
    %v89 = vadd.f32 %v87, %v88
    %90 = vadd.xlane.f32.xlu0 %v89
    %v91 = vpop.xlane.xlu0 %90
    %v92 = vadd.f32 %v86, %v91
    %vm93 = vcmask 7168
    %94 = vst.msk [vmem:[#allocation2] sm:$0xff] %vm93, %v92
    %v95 = vld [vmem:[#allocation3] sm:$0xff]
    %v96 = vadd.f32 %v59, %v61
    %97 = vadd.xlane.f32.xlu0 %v96
    %v98 = vpop.xlane.xlu0 %97
    %v99 = vadd.f32 %v95, %v98
    %100 = vst.msk [vmem:[#allocation3] sm:$0xff] %vm93, %v99
    %v101 = vld [vmem:[#allocation4] sm:$0xff]
    %v102 = vadd.f32 %v48, %v49
    %103 = vadd.xlane.f32.xlu0 %v102
    %v104 = vpop.xlane.xlu0 %103
    %v105 = vadd.f32 %v101, %v104
    %106 = vst.msk [vmem:[#allocation4] sm:$0xff] %vm93, %v105
    %v107 = vld [vmem:[#allocation5] sm:$0xff]
    %v108 = vadd.f32 %v84, %v85
    %109 = vadd.xlane.f32.xlu0 %v108
    %v110 = vpop.xlane.xlu0 %109
    %v111 = vadd.f32 %v107, %v110
    %112 = vst.msk [vmem:[#allocation5] sm:$0xff] %vm93, %v111
    // Predicated region
    $region22: #{tpu_custom_call.1} parent=1 // pred_check
      %p113 = pneg %p37
    $region23: #{tpu_custom_call.1} parent=1 // pred_check_branch
      %115 = sbr.rel (%p113) target = $region25
    $region24: #{tpu_custom_call.1} parent=1 // pred_region
      %v116 = vld [vmem:[#allocation2] sm:$0xff]
      %v117 = vmul.f32 %v116, 2.0
      %v118 = vadd.f32 %v117, 1.0
      %v119 = vld [vmem:[#allocation3] sm:$0xff]
      %v120 = vld [vmem:[#allocation4] sm:$0xff]
      %v121 = vadd.f32 %v119, %v120
      %v122 = vadd.f32 %v121, 1.0
      %v123 = vrcp.pop %v122
      %v124 = vmul.f32 %v118, %v123
      %125 = vst.msk [vmem:[%s3] sm:$0xff] %vm93, %v124
      %v126 = vld [vmem:[#allocation5] sm:$0xff]
      %127 = vst.msk [vmem:[%s2] sm:$0xff] %vm93, %v126
    $region25: #{tpu_custom_call.1} parent=1 // pred_fallthru
      _
    // Predicated region
    $region26: #{tpu_custom_call.1} parent=1 // pred_check
      _
    $region27: #{tpu_custom_call.1} parent=1 // pred_check_branch
      %129 = sbr.rel (0) target = $region29
    $region28: #{tpu_custom_call.1} parent=1 // pred_region
      _
    $region29: #{tpu_custom_call.1} parent=1 // pred_fallthru
      _
    // Predicated region
    $region30: #{tpu_custom_call.1} parent=1 // pred_check
      _
    $region31: #{tpu_custom_call.1} parent=1 // pred_check_branch
      %131 = sbr.rel (0) target = $region33
    $region32: #{tpu_custom_call.1} parent=1 // pred_region
      _
    $region33: #{tpu_custom_call.1} parent=1 // pred_fallthru
      _
    // Predicated region
    $region34: #{tpu_custom_call.1} parent=1 // pred_check
      _
    $region35: #{tpu_custom_call.1} parent=1 // pred_check_branch
      %133 = sbr.rel (0) target = $region37
    $region36: #{tpu_custom_call.1} parent=1 // pred_region
      _
    $region37: #{tpu_custom_call.1} parent=1 // pred_fallthru
      _
    // Predicated region
    $region38: #{tpu_custom_call.1} parent=1 // pred_check
      _
    $region39: #{tpu_custom_call.1} parent=1 // pred_check_branch
      %135 = sbr.rel (0) target = $region41
    $region40: #{tpu_custom_call.1} parent=1 // pred_region
      _
    $region41: #{tpu_custom_call.1} parent=1 // pred_fallthru
      _
    %136 = vsyncpa [#allocation7], 1
    %137 = vsyncpa [#allocation9], 1

</llo_original>
